<compile_context>
chip_gen: v7x
topology: tpu7x:2x2x1
jax: 0.10.0
libtpu: 0.0.40
codegen_flags: <defaults>
</compile_context>

<pallas_src>
import functools
import math

import jax
import jax.numpy as jnp
from jax.experimental import pallas as pl
from jax.experimental.pallas import tpu as pltpu

EPS = 1e-5
VMEM_LIMIT = 48 * 1024 * 1024          # <= ~48 MiB: safe on v7x (64 MiB VMEM)
FUSED_M_MAX = 512                      # single-M-tile fused path cap
_VMEM = pl.BlockSpec(memory_space=pltpu.MemorySpace.VMEM)


# ------------------------------ tiling helpers ------------------------------

def _rup(x, m):
    return (x + m - 1) // m * m


def _pick_div(x, cap):
    """Largest multiple of 128 <= cap dividing x (x is a multiple of 128)."""
    t = max(min(x, cap) // 128 * 128, 128)
    while x % t:
        t -= 128
    return t


def _kc_tiles(K, C):
    """K (lane-contraction) and Cout padding / tile sizes."""
    Kp = _rup(K, 128)
    # No K tiling for ResNet-50 (max K = 3*3*512 = 4608); tiles stay well
    # under the VMEM budget even double-buffered.
    tk = Kp if Kp <= 4608 else _pick_div(Kp, 4608)
    Cp = _rup(C, 128)
    # tn: prefer >= 2 Cout tiles (v7x megacore) when Cp allows, up to 512.
    if Cp <= 128:
        tn = Cp
    elif Cp <= 1024:
        tn = Cp // 2
    else:
        tn = 512
    return Kp, tk, Cp, tn


# ------------------------------ Pallas kernels ------------------------------

def _mask_rows(y, m_valid):
    """Zero rows >= m_valid (keeps padded rows of the 2-D activation zero)."""
    if m_valid >= y.shape[0]:
        return y
    rows = jax.lax.broadcasted_iota(jnp.int32, y.shape, 0)
    return jnp.where(rows < m_valid, y, 0.0)


def _bn_from_batch(y, g, b, inv_m, m_valid):
    """Training-mode BN of a fully-resident (Mp, tn) f32 tile.

    Padded rows of y are exactly zero, so the mean (sum * 1/M_true) is exact;
    the centered second pass masks padded rows before squaring.
    """
    mu = jnp.sum(y, axis=0, keepdims=True) * inv_m
    d = y - mu
    if m_valid < y.shape[0]:
        rows = jax.lax.broadcasted_iota(jnp.int32, y.shape, 0)
        d = jnp.where(rows < m_valid, d, 0.0)
    var = jnp.sum(d * d, axis=0, keepdims=True) * inv_m
    return d * jax.lax.rsqrt(var + EPS) * g + b


def conv_bn_fused_kernel(x_ref, w_ref, g_ref, b_ref, o_ref, acc_ref,
                         *, inv_m, relu, m_valid):
    """Y = X @ W (bf16 in, f32 acc) with BN(+ReLU) fused into the K finalize.

    Grid: (Cout tiles [parallel], K tiles [arbitrary]); single M tile.
    """
    k = pl.program_id(1)
    nk = pl.num_programs(1)

    @pl.when(k == 0)
    def _():
        acc_ref[...] = jnp.zeros_like(acc_ref)

    acc_ref[...] += jnp.dot(x_ref[...], w_ref[...],
                            preferred_element_type=jnp.float32)

    @pl.when(k == nk - 1)
    def _():
        yn = _bn_from_batch(acc_ref[...], g_ref[...], b_ref[...], inv_m, m_valid)
        if relu:
            yn = jnp.maximum(yn, 0.0)
        o_ref[...] = _mask_rows(yn, m_valid).astype(o_ref.dtype)


def conv_bn_add_relu_fused_kernel(x_ref, w_ref, g_ref, b_ref, r_ref, o_ref,
                                  acc_ref, *, inv_m, m_valid):
    """Same as above, plus residual add + ReLU (ResNet block tail)."""
    k = pl.program_id(1)
    nk = pl.num_programs(1)

    @pl.when(k == 0)
    def _():
        acc_ref[...] = jnp.zeros_like(acc_ref)

    acc_ref[...] += jnp.dot(x_ref[...], w_ref[...],
                            preferred_element_type=jnp.float32)

    @pl.when(k == nk - 1)
    def _():
        yn = _bn_from_batch(acc_ref[...], g_ref[...], b_ref[...], inv_m, m_valid)
        yn = jnp.maximum(yn + r_ref[...].astype(jnp.float32), 0.0)
        o_ref[...] = _mask_rows(yn, m_valid).astype(o_ref.dtype)


# ---- two-pass fallback (only used if M does not fit a single tile) ----------

def matmul_stats_kernel(x_ref, w_ref, y_ref, sum_ref, ssq_ref, acc_ref):
    """Y = X @ W (bf16 out) + per-channel sum / sum-of-squares over M tiles."""
    m = pl.program_id(1)
    k = pl.program_id(2)
    nk = pl.num_programs(2)

    @pl.when(k == 0)
    def _():
        acc_ref[...] = jnp.zeros_like(acc_ref)

    acc_ref[...] += jnp.dot(x_ref[...], w_ref[...],
                            preferred_element_type=jnp.float32)

    @pl.when((k == nk - 1) & (m == 0))
    def _():
        sum_ref[...] = jnp.zeros_like(sum_ref)
        ssq_ref[...] = jnp.zeros_like(ssq_ref)

    @pl.when(k == nk - 1)
    def _():
        y = acc_ref[...]
        y_ref[...] = y.astype(y_ref.dtype)
        sum_ref[...] += jnp.sum(y, axis=0, keepdims=True)
        ssq_ref[...] += jnp.sum(y * y, axis=0, keepdims=True)


def bn_act_kernel(y_ref, s_ref, ss_ref, g_ref, b_ref, o_ref,
                  *, inv_m, relu, m_valid, tm):
    mu = s_ref[...] * inv_m
    var = jnp.maximum(ss_ref[...] * inv_m - mu * mu, 0.0)
    yn = ((y_ref[...].astype(jnp.float32) - mu) * jax.lax.rsqrt(var + EPS)
          * g_ref[...] + b_ref[...])
    if relu:
        yn = jnp.maximum(yn, 0.0)
    rows = jax.lax.broadcasted_iota(jnp.int32, yn.shape, 0) + pl.program_id(0) * tm
    o_ref[...] = jnp.where(rows < m_valid, yn, 0.0).astype(o_ref.dtype)


def bn_add_relu_kernel(y_ref, s_ref, ss_ref, g_ref, b_ref, r_ref, o_ref,
                       *, inv_m, m_valid, tm):
    mu = s_ref[...] * inv_m
    var = jnp.maximum(ss_ref[...] * inv_m - mu * mu, 0.0)
    yn = ((y_ref[...].astype(jnp.float32) - mu) * jax.lax.rsqrt(var + EPS)
          * g_ref[...] + b_ref[...])
    yn = jnp.maximum(yn + r_ref[...].astype(jnp.float32), 0.0)
    rows = jax.lax.broadcasted_iota(jnp.int32, yn.shape, 0) + pl.program_id(0) * tm
    o_ref[...] = jnp.where(rows < m_valid, yn, 0.0).astype(o_ref.dtype)


def linear_relu_kernel(x_ref, w_ref, b_ref, o_ref):
    y = jnp.dot(x_ref[...], w_ref[...],
                preferred_element_type=jnp.float32) + b_ref[...]
    o_ref[...] = jnp.maximum(y, 0.0)     # spec: x = F.relu(self.fc1(x))


# -------------------------------- wrappers ----------------------------------

def _conv_fused(xp, wp, g, b, r, *, tk, tn, Mp, Kp, Cp, M, relu):
    grid = (Cp // tn, Kp // tk)
    x_spec = pl.BlockSpec((Mp, tk), lambda n, k: (0, k))
    w_spec = pl.BlockSpec((tk, tn), lambda n, k: (k, n))
    row_spec = pl.BlockSpec((1, tn), lambda n, k: (0, n))
    tile_spec = pl.BlockSpec((Mp, tn), lambda n, k: (0, n))
    inv_m = 1.0 / float(M)
    if r is None:
        kern = functools.partial(conv_bn_fused_kernel,
                                 inv_m=inv_m, relu=relu, m_valid=M)
        ins = (xp, wp, g, b)
        in_specs = [x_spec, w_spec, row_spec, row_spec]
    else:
        # ResNet semantics: ReLU always follows the residual add.
        kern = functools.partial(conv_bn_add_relu_fused_kernel,
                                 inv_m=inv_m, m_valid=M)
        ins = (xp, wp, g, b, r)
        in_specs = [x_spec, w_spec, row_spec, row_spec, tile_spec]
    return pl.pallas_call(
        kern,
        out_shape=jax.ShapeDtypeStruct((Mp, Cp), jnp.bfloat16),
        grid_spec=pltpu.PrefetchScalarGridSpec(
            num_scalar_prefetch=0,
            grid=grid,
            in_specs=in_specs,
            out_specs=tile_spec,
            scratch_shapes=[pltpu.VMEM((Mp, tn), jnp.float32)]),
        compiler_params=pltpu.CompilerParams(
            dimension_semantics=("parallel", "arbitrary"),
            vmem_limit_bytes=VMEM_LIMIT),
    )(*ins)


def _matmul_stats(xp, wp, tm, tk, tn, Mp, Kp, Cp):
    grid = (Cp // tn, Mp // tm, Kp // tk)
    return pl.pallas_call(
        matmul_stats_kernel,
        out_shape=(jax.ShapeDtypeStruct((Mp, Cp), jnp.bfloat16),
                   jax.ShapeDtypeStruct((1, Cp), jnp.float32),
                   jax.ShapeDtypeStruct((1, Cp), jnp.float32)),
        grid_spec=pltpu.PrefetchScalarGridSpec(
            num_scalar_prefetch=0,
            grid=grid,
            in_specs=[pl.BlockSpec((tm, tk), lambda n, m, k: (m, k)),
                      pl.BlockSpec((tk, tn), lambda n, m, k: (k, n))],
            out_specs=(pl.BlockSpec((tm, tn), lambda n, m, k: (m, n)),
                       pl.BlockSpec((1, tn), lambda n, m, k: (0, n)),
                       pl.BlockSpec((1, tn), lambda n, m, k: (0, n))),
            scratch_shapes=[pltpu.VMEM((tm, tn), jnp.float32)]),
        compiler_params=pltpu.CompilerParams(
            dimension_semantics=("parallel", "arbitrary", "arbitrary"),
            vmem_limit_bytes=VMEM_LIMIT),
    )(xp, wp)


def _bn_act(y, s, ss, g, b, M, tm, tn, Mp, Cp, *, relu, residual=None):
    grid = (Mp // tm, Cp // tn)
    inv_m = 1.0 / float(M)
    tile_spec = pl.BlockSpec((tm, tn), lambda i, j: (i, j))
    row_spec = pl.BlockSpec((1, tn), lambda i, j: (0, j))
    if residual is None:
        kern = functools.partial(bn_act_kernel, inv_m=inv_m, relu=relu,
                                 m_valid=M, tm=tm)
        ins = (y, s, ss, g, b)
        in_specs = [tile_spec, row_spec, row_spec, row_spec, row_spec]
    else:
        kern = functools.partial(bn_add_relu_kernel, inv_m=inv_m,
                                 m_valid=M, tm=tm)
        ins = (y, s, ss, g, b, residual)
        in_specs = [tile_spec, row_spec, row_spec, row_spec, row_spec, tile_spec]
    return pl.pallas_call(
        kern,
        out_shape=jax.ShapeDtypeStruct((Mp, Cp), jnp.bfloat16),
        grid_spec=pltpu.PrefetchScalarGridSpec(
            num_scalar_prefetch=0,
            grid=grid,
            in_specs=in_specs,
            out_specs=tile_spec),
        compiler_params=pltpu.CompilerParams(
            dimension_semantics=("parallel", "parallel"),
            vmem_limit_bytes=VMEM_LIMIT),
    )(*ins)


# --------------------------- activation plumbing -----------------------------

def act_to_4d(a):
    """Padded 2-D (Mp, Cp) activation -> (N, H, W, C) NHWC bf16 view."""
    return a['data'][:a['m'], :a['c']].reshape(a['n'], a['h'], a['w'], a['c'])


def _im2col(x, kh, kw, stride, pad):
    """x: (N,H,W,C) -> patches (N*Ho*Wo, KH*KW*C) with (ki,kj,c) ordering."""
    # TODO(synk): 3x3 / 7x7 convs still materialize im2col patches in HBM
    # (plain-JAX gather); an implicit-GEMM tap grid axis would remove this.
    n, h, w, c = x.shape
    ho = (h + 2 * pad - kh) // stride + 1
    wo = (w + 2 * pad - kw) // stride + 1
    xp = jnp.pad(x, ((0, 0), (pad, pad), (pad, pad), (0, 0)))
    cols = []
    for ki in range(kh):
        for kj in range(kw):
            cols.append(xp[:, ki:ki + stride * ho:stride,
                           kj:kj + stride * wo:stride, :])
    patches = jnp.stack(cols, axis=3)                  # (N,Ho,Wo,KH*KW,C)
    return patches.reshape(n * ho * wo, kh * kw * c), (n, ho, wo)


def conv_bn_act(x, cp, *, stride, relu, residual=None):
    """Conv (bias cancelled by training-mode BN) + BN + optional ReLU /
    fused residual-add+ReLU.

    `x` is either an NHWC bf16 array or a padded 2-D activation dict; the
    result is always a padded 2-D activation dict (padded rows/cols zero).
    """
    kh, kw = cp['kh'], cp['kw']
    K, Kp, tk = cp['K'], cp['Kp'], cp['tk']
    cout, Cp, tn = cp['cout'], cp['Cp'], cp['tn']

    if isinstance(x, dict) and kh == 1 and kw == 1 and stride == 1:
        # Stride-1 1x1 conv consumes the padded 2-D layout directly: no
        # slice / reshape / re-pad HBM copies between consecutive convs.
        assert x['data'].shape[1] == Kp
        xp = x['data']
        n, ho, wo, M = x['n'], x['h'], x['w'], x['m']
        Mp = xp.shape[0]
    else:
        x4 = act_to_4d(x) if isinstance(x, dict) else x
        if kh == 1 and kw == 1:
            xs = x4 if stride == 1 else x4[:, ::stride, ::stride, :]
            n, ho, wo, cin = xs.shape
            patches = xs.reshape(n * ho * wo, cin)      # no im2col for 1x1
        else:
            pad = (kh - 1) // 2
            patches, (n, ho, wo) = _im2col(x4, kh, kw, stride, pad)
        M = n * ho * wo
        Mp = _rup(M, 16)
        xp = jnp.pad(patches.astype(jnp.bfloat16), ((0, Mp - M), (0, Kp - K)))

    if Mp <= FUSED_M_MAX:
        # Single M tile: batch statistics are fully known at the last K step,
        # so BN(+ReLU)(+residual) is fused into the matmul epilogue.
        r = None
        if residual is not None:
            r = residual['data']
            assert r.shape == (Mp, Cp)
        out = _conv_fused(xp, cp['w'], cp['g'], cp['b'], r,
                          tk=tk, tn=tn, Mp=Mp, Kp=Kp, Cp=Cp, M=M, relu=relu)
    else:
        # Fallback two-pass scheme for multiple M tiles (not hit at this size).
        tm = 256
        Mp2 = _rup(M, tm)
        if xp.shape[0] != Mp2:
            xp = jnp.pad(xp, ((0, Mp2 - xp.shape[0]), (0, 0)))
        y, s, ss = _matmul_stats(xp, cp['w'], tm, tk, tn, Mp2, Kp, Cp)
        r = None
        if residual is not None:
            r = residual['data']
            if r.shape[0] != Mp2:
                r = jnp.pad(r, ((0, Mp2 - r.shape[0]), (0, 0)))
        out = _bn_act(y, s, ss, cp['g'], cp['b'], M, tm, tn, Mp2, Cp,
                      relu=relu, residual=r)

    return {'data': out, 'n': n, 'h': ho, 'w': wo, 'c': cout, 'm': M}


def maxpool_3x3_s2_p1(x):
    # TODO(synk): kept as a plain-JAX maximum tree (XLA-fused, memory-bound);
    # a Pallas kernel here would only add an HBM round trip.
    n, h, w, c = x.shape
    ho = (h + 2 - 3) // 2 + 1
    wo = (w + 2 - 3) // 2 + 1
    xp = jnp.pad(x, ((0, 0), (1, 1), (1, 1), (0, 0)),
                 constant_values=-jnp.inf)
    out = None
    for ki in range(3):
        for kj in range(3):
            v = xp[:, ki:ki + 2 * ho:2, kj:kj + 2 * wo:2, :]
            out = v if out is None else jnp.maximum(out, v)
    return out


def block_forward(x, bp):
    """x: activation dict (or NHWC array for the very first block)."""
    f = conv_bn_act(x, bp['c1'], stride=bp['stride'], relu=True)
    f = conv_bn_act(f, bp['c2'], stride=1, relu=True)
    if 'cs' in bp:
        s = conv_bn_act(x, bp['cs'], stride=bp['stride'], relu=False)
    else:
        s = x          # identity shortcut: already a padded 2-D activation
    # Third conv: BN + residual add + ReLU fused into the matmul epilogue.
    return conv_bn_act(f, bp['c3'], stride=1, relu=True, residual=s)


def net_forward(x_nchw, params):
    # Input is NCHW (PyTorch convention); compute in NHWC bf16 internally.
    x = jnp.transpose(x_nchw, (0, 2, 3, 1)).astype(jnp.bfloat16)
    a = conv_bn_act(x, params['c1'], stride=2, relu=True)
    x4 = maxpool_3x3_s2_p1(act_to_4d(a))
    a = x4                               # first layer1 block takes NHWC input
    for layer in ('layer1', 'layer2', 'layer3', 'layer4'):
        for bp in params[layer]:
            a = block_forward(a, bp)
    # TODO(synk): AdaptiveAvgPool2d((1,1)) as a plain-JAX mean (XLA reduce).
    pooled = jnp.mean(act_to_4d(a).astype(jnp.float32), axis=(1, 2))  # (N,2048)
    n = pooled.shape[0]
    nc = params['fc_nc']
    NCp = params['fc_w'].shape[1]
    out = pl.pallas_call(
        linear_relu_kernel,
        out_shape=jax.ShapeDtypeStruct((n, NCp), jnp.float32),
        in_specs=[_VMEM, _VMEM, _VMEM],
        out_specs=_VMEM,
        compiler_params=pltpu.CompilerParams(vmem_limit_bytes=VMEM_LIMIT),
    )(pooled.astype(jnp.bfloat16), params['fc_w'], params['fc_b'])
    return out[:, :nc]


# ---------------------- parameter creation & preparation --------------------

def build_params(key, num_classes=2):
    """Raw PyTorch-layout parameters (OIHW conv weights, BN gamma/beta)."""
    keys = jax.random.split(key, 256)
    kidx = [0]

    def nk():
        k = keys[kidx[0]]
        kidx[0] += 1
        return k

    def conv_w(cout, cin, kh, kw):
        # kaiming_normal_(mode='fan_out', nonlinearity='relu')
        std = math.sqrt(2.0 / (cout * kh * kw))
        return jax.random.normal(nk(), (cout, cin, kh, kw), jnp.float32) * std

    def bn(cout):
        return jnp.ones((cout,), jnp.float32), jnp.zeros((cout,), jnp.float32)

    params = {}
    # conv1 bias (zero-init) is dropped: any per-channel constant added before
    # training-mode BatchNorm is cancelled by the mean subtraction.
    params['conv1_w'] = conv_w(64, 3, 7, 7)
    params['bn1_g'], params['bn1_b'] = bn(64)

    def make_layer(in_ch, out_ch, num_blocks, stride):
        blocks = []
        strides = [stride] + [1] * (num_blocks - 1)
        ic = in_ch
        for s in strides:
            bp = {'stride': s, 'w1': conv_w(out_ch, ic, 1, 1)}
            bp['g1'], bp['b1'] = bn(out_ch)
            bp['w2'] = conv_w(out_ch, out_ch, 3, 3)
            bp['g2'], bp['b2'] = bn(out_ch)
            bp['w3'] = conv_w(out_ch * 4, out_ch, 1, 1)
            bp['g3'], bp['b3'] = bn(out_ch * 4)
            if s != 1 or ic != out_ch * 4:
                bp['ws'] = conv_w(out_ch * 4, ic, 1, 1)
                bp['gs'], bp['bs'] = bn(out_ch * 4)
            blocks.append(bp)
            ic = out_ch * 4
        return blocks

    params['layer1'] = make_layer(64, 64, 3, 1)
    params['layer2'] = make_layer(256, 128, 4, 2)
    params['layer3'] = make_layer(512, 256, 6, 2)
    params['layer4'] = make_layer(1024, 512, 3, 2)

    params['fc_w'] = jax.random.normal(nk(), (num_classes, 512 * 4),
                                       jnp.float32) * 0.01
    params['fc_b'] = jnp.zeros((num_classes,), jnp.float32)
    return params


def _prep_conv(w, gamma, beta):
    """One-time layout transform: OIHW -> (K, Cout) bf16, padded to tiles."""
    cout, cin, kh, kw = w.shape
    K = kh * kw * cin
    Kp, tk, Cp, tn = _kc_tiles(K, cout)
    w2 = jnp.transpose(w, (2, 3, 1, 0)).reshape(K, cout)
    w2 = jnp.pad(w2, ((0, Kp - K), (0, Cp - cout))).astype(jnp.bfloat16)
    g = jnp.pad(gamma, (0, Cp - cout)).reshape(1, Cp).astype(jnp.float32)
    b = jnp.pad(beta, (0, Cp - cout)).reshape(1, Cp).astype(jnp.float32)
    return {'w': w2, 'g': g, 'b': b, 'kh': kh, 'kw': kw,
            'K': K, 'Kp': Kp, 'tk': tk, 'cout': cout, 'Cp': Cp, 'tn': tn}


def prepare_params(raw):
    p = {'c1': _prep_conv(raw['conv1_w'], raw['bn1_g'], raw['bn1_b'])}
    for layer in ('layer1', 'layer2', 'layer3', 'layer4'):
        blocks = []
        for bp in raw[layer]:
            nb = {'stride': bp['stride'],
                  'c1': _prep_conv(bp['w1'], bp['g1'], bp['b1']),
                  'c2': _prep_conv(bp['w2'], bp['g2'], bp['b2']),
                  'c3': _prep_conv(bp['w3'], bp['g3'], bp['b3'])}
            if 'ws' in bp:
                nb['cs'] = _prep_conv(bp['ws'], bp['gs'], bp['bs'])
            blocks.append(nb)
        p[layer] = blocks
    nc = raw['fc_w'].shape[0]
    NCp = _rup(nc, 128)                        # lane-dense fc output
    p['fc_w'] = jnp.pad(raw['fc_w'].T, ((0, 0), (0, NCp - nc))).astype(jnp.bfloat16)
    p['fc_b'] = jnp.pad(raw['fc_b'], (0, NCp - nc)).reshape(1, NCp).astype(jnp.float32)
    p['fc_nc'] = nc
    return p


# ----------------------------------- main ------------------------------------

if __name__ == "__main__":
    key = jax.random.PRNGKey(0)
    k_param, k_x = jax.random.split(key)
    raw = build_params(k_param, num_classes=2)
    params = prepare_params(raw)      # one-time weight layout / padding / bf16
    x = jax.random.normal(k_x, (2, 3, 16, 16), jnp.float32)
    y = net_forward(x, params)
    y = jax.block_until_ready(y)
    assert y.shape == (2, 2) and y.dtype == jnp.float32
    assert bool(jnp.all(jnp.isfinite(y)))
    print("KERNEL_OK")
</pallas_src>

<mosaic_0001>
module attributes {stable_mosaic.version = 11 : i64} {
  func.func @conv_bn_fused_kernel(%arg0: i32, %arg1: i32, %arg2: memref<128x256xbf16, #tpu.memory_space<vmem>>, %arg3: memref<256x128xbf16, #tpu.memory_space<vmem>>, %arg4: memref<1x128xf32, #tpu.memory_space<vmem>>, %arg5: memref<1x128xf32, #tpu.memory_space<vmem>>, %arg6: memref<128x128xbf16, #tpu.memory_space<vmem>>, %arg7: memref<128x128xf32, #tpu.memory_space<vmem>>) attributes {dimension_semantics = [#tpu.dimension_semantics<parallel>, #tpu.dimension_semantics<arbitrary>], iteration_bounds = array<i64: 1, 1>, scalar_prefetch = 0 : i64, scratch_operands = 1 : i64, tpu.core_type = #tpu.core_type<tc>, window_params = [{transform_indices = @transform_0, window_bounds = array<i64: 128, 256>}, {transform_indices = @transform_1, window_bounds = array<i64: 256, 128>}, {transform_indices = @transform_2, window_bounds = array<i64: 1, 128>}, {transform_indices = @transform_3, window_bounds = array<i64: 1, 128>}, {transform_indices = @transform_4, window_bounds = array<i64: 128, 128>}]} {
    %c0_i32 = arith.constant 0 : i32
    %0 = arith.cmpi eq, %arg1, %c0_i32 : i32
    %1 = arith.extui %0 : i1 to i32
    %c0_i32_0 = arith.constant 0 : i32
    %2 = arith.cmpi ne, %1, %c0_i32_0 : i32
    scf.if %2 {
      %cst_10 = arith.constant 0.000000e+00 : f32
      %12 = vector.broadcast %cst_10 : f32 to vector<128x128xf32>
      %c0_11 = arith.constant 0 : index
      %c0_12 = arith.constant 0 : index
      %13 = vector.load %arg7[%c0_11, %c0_12] : memref<128x128xf32, #tpu.memory_space<vmem>>, vector<128x128xf32>
      tpu.vector_store %arg7[%c0_11, %c0_12], %12 {strides = array<i32>} : memref<128x128xf32, #tpu.memory_space<vmem>>, vector<128x128xf32>,
    } else {
    }
    %c0 = arith.constant 0 : index
    %c0_1 = arith.constant 0 : index
    %3 = vector.load %arg7[%c0, %c0_1] : memref<128x128xf32, #tpu.memory_space<vmem>>, vector<128x128xf32>
    %c0_2 = arith.constant 0 : index
    %c0_3 = arith.constant 0 : index
    %4 = vector.load %arg2[%c0_2, %c0_3] : memref<128x256xbf16, #tpu.memory_space<vmem>>, vector<128x256xbf16>
    %c0_4 = arith.constant 0 : index
    %c0_5 = arith.constant 0 : index
    %5 = vector.load %arg3[%c0_4, %c0_5] : memref<256x128xbf16, #tpu.memory_space<vmem>>, vector<256x128xbf16>
    %cst = arith.constant dense<0.000000e+00> : vector<128x128xf32>
    %6 = tpu.matmul %4, %5, %cst {dimension_numbers = #tpu.dot_dimension_numbers<[1], [0], [0], [1], [0, 0, 1, 1], [], []>} : vector<128x256xbf16>, vector<256x128xbf16>, vector<128x128xf32> -> vector<128x128xf32>
    %7 = arith.addf %3, %6 : vector<128x128xf32>
    %c0_6 = arith.constant 0 : index
    %c0_7 = arith.constant 0 : index
    %8 = vector.load %arg7[%c0_6, %c0_7] : memref<128x128xf32, #tpu.memory_space<vmem>>, vector<128x128xf32>
    tpu.vector_store %arg7[%c0_6, %c0_7], %7 {strides = array<i32>} : memref<128x128xf32, #tpu.memory_space<vmem>>, vector<128x128xf32>,
    %c0_i32_8 = arith.constant 0 : i32
    %9 = arith.cmpi eq, %arg1, %c0_i32_8 : i32
    %10 = arith.extui %9 : i1 to i32
    %c0_i32_9 = arith.constant 0 : i32
    %11 = arith.cmpi ne, %10, %c0_i32_9 : i32
    scf.if %11 {
      %c0_10 = arith.constant 0 : index
      %c0_11 = arith.constant 0 : index
      %12 = vector.load %arg7[%c0_10, %c0_11] : memref<128x128xf32, #tpu.memory_space<vmem>>, vector<128x128xf32>
      %c0_12 = arith.constant 0 : index
      %c0_13 = arith.constant 0 : index
      %13 = vector.load %arg4[%c0_12, %c0_13] : memref<1x128xf32, #tpu.memory_space<vmem>>, vector<1x128xf32>
      %c0_14 = arith.constant 0 : index
      %c0_15 = arith.constant 0 : index
      %14 = vector.load %arg5[%c0_14, %c0_15] : memref<1x128xf32, #tpu.memory_space<vmem>>, vector<1x128xf32>
      %cst_16 = arith.constant dense<0.000000e+00> : vector<128xf32>
      %15 = vector.multi_reduction <add>, %12, %cst_16 [0] : vector<128x128xf32> to vector<128xf32>
      %16 = vector.shape_cast %15 : vector<128xf32> to vector<1x128xf32>
      %cst_17 = arith.constant 7.812500e-03 : f32
      %17 = vector.broadcast %cst_17 : f32 to vector<1x128xf32>
      %18 = arith.mulf %16, %17 : vector<1x128xf32>
      %19 = vector.broadcast %18 : vector<1x128xf32> to vector<128x128xf32>
      %20 = arith.subf %12, %19 : vector<128x128xf32>
      %21 = arith.mulf %20, %20 : vector<128x128xf32>
      %cst_18 = arith.constant dense<0.000000e+00> : vector<128xf32>
      %22 = vector.multi_reduction <add>, %21, %cst_18 [0] : vector<128x128xf32> to vector<128xf32>
      %23 = vector.shape_cast %22 : vector<128xf32> to vector<1x128xf32>
      %cst_19 = arith.constant 7.812500e-03 : f32
      %24 = vector.broadcast %cst_19 : f32 to vector<1x128xf32>
      %25 = arith.mulf %23, %24 : vector<1x128xf32>
      %cst_20 = arith.constant 9.99999974E-6 : f32
      %26 = vector.broadcast %cst_20 : f32 to vector<1x128xf32>
      %27 = arith.addf %25, %26 : vector<1x128xf32>
      %28 = math.rsqrt %27 : vector<1x128xf32>
      %29 = vector.broadcast %28 : vector<1x128xf32> to vector<128x128xf32>
      %30 = arith.mulf %20, %29 : vector<128x128xf32>
      %31 = vector.broadcast %13 : vector<1x128xf32> to vector<128x128xf32>
      %32 = arith.mulf %30, %31 : vector<128x128xf32>
      %33 = vector.broadcast %14 : vector<1x128xf32> to vector<128x128xf32>
      %34 = arith.addf %32, %33 : vector<128x128xf32>
      %cst_21 = arith.constant 0.000000e+00 : f32
      %35 = vector.broadcast %cst_21 : f32 to vector<128x128xf32>
      %36 = arith.maximumf %34, %35 : vector<128x128xf32>
      %37 = arith.truncf %36 : vector<128x128xf32> to vector<128x128xbf16>
      %c0_22 = arith.constant 0 : index
      %c0_23 = arith.constant 0 : index
      %38 = vector.load %arg6[%c0_22, %c0_23] : memref<128x128xbf16, #tpu.memory_space<vmem>>, vector<128x128xbf16>
      tpu.vector_store %arg6[%c0_22, %c0_23], %37 {strides = array<i32>} : memref<128x128xbf16, #tpu.memory_space<vmem>>, vector<128x128xbf16>,
    } else {
    }
    return
  }
  func.func @transform_0(%arg0: i32, %arg1: i32) -> (i32, i32) {
    %c0_i32 = arith.constant 0 : i32
    %c0_i32_0 = arith.constant 0 : i32
    return %c0_i32, %arg1 : i32, i32
  }
  func.func @transform_1(%arg0: i32, %arg1: i32) -> (i32, i32) {
    %c0_i32 = arith.constant 0 : i32
    return %arg1, %arg0 : i32, i32
  }
  func.func @transform_2(%arg0: i32, %arg1: i32) -> (i32, i32) {
    %c0_i32 = arith.constant 0 : i32
    %c0_i32_0 = arith.constant 0 : i32
    return %c0_i32, %arg0 : i32, i32
  }
  func.func @transform_3(%arg0: i32, %arg1: i32) -> (i32, i32) {
    %c0_i32 = arith.constant 0 : i32
    %c0_i32_0 = arith.constant 0 : i32
    return %c0_i32, %arg0 : i32, i32
  }
  func.func @transform_4(%arg0: i32, %arg1: i32) -> (i32, i32) {
    %c0_i32 = arith.constant 0 : i32
    %c0_i32_0 = arith.constant 0 : i32
    return %c0_i32, %arg0 : i32, i32
  }
}

</mosaic_0001>

<llo_original>
// kernel: tpu_custom_call.1
$region0: #{tpu_custom_call.1}
  #allocation0 [shape = 'u32[]', space=smem, size = 0x4, offset = 0x4, fixed_abs, tag = 'smem constant byte address 0x4 - core index']
  #allocation1 [shape = 'u32[144,128]{1,0:T(1,128)}', space=vmem, size = 0x12000, scoped, tag = 'internal scratch']
  #allocation2 [shape = 'f32[128,128]{1,0:T(8,128)}', space=vmem, size = 0x10000, scoped, tag = 'scratch operand']
  %s0 = inlined_call_operand.hbm [shape: bf16[128,256], index: 0, kind: input, shape index: {}]
  %s1 = inlined_call_operand.hbm [shape: bf16[256,128], index: 1, kind: input, shape index: {}]
  %s2 = inlined_call_operand.vmem [shape: f32[1,128], index: 2, kind: input, shape index: {}]
  %s3 = inlined_call_operand.vmem [shape: f32[1,128], index: 3, kind: input, shape index: {}]
  %s4 = inlined_call_operand.hbm [shape: bf16[128,128], index: 4, kind: output, shape index: {}]
  %s5 = sld [smem:[#allocation0]]
  $region42: #{tpu_custom_call.1} parent=0
    _
  %s7 = ssub.s32 1, %s5
  %s8 = scalar_select 0, %s7, %s5
  $region1: #{tpu_custom_call.1} parent=0
    #allocation3 [shape = 'u8[65536]{0}', space=vmem, size = 0x10000, scoped, tag = 'input window, operand 0, single buffered']
    #allocation4 [shape = 's32[1]{0}', space=sflag, size = 0x4, scoped, tag = 'scoped memory for tpu_custom_call.1']
    #allocation5 [shape = 's32[1]{0}', space=sflag, size = 0x4, scoped, tag = 'scoped memory for tpu_custom_call.1']
    #allocation6 [shape = 'u8[65536]{0}', space=vmem, size = 0x10000, scoped, tag = 'input window, operand 1, single buffered']
    #allocation7 [shape = 's32[1]{0}', space=sflag, size = 0x4, scoped, tag = 'scoped memory for tpu_custom_call.1']
    #allocation8 [shape = 'u8[32768]{0}', space=vmem, size = 0x8000, scoped, tag = 'output window, operand 0, single buffered']
    %9 = vsyncpa [#allocation4], 0
    %10 = vsyncpa [#allocation7], 0
    %11 = vsyncpa [#allocation5], 0
    // Predicated region
    $region2: #{tpu_custom_call.1} parent=1 // pred_check
      _
    $region3: #{tpu_custom_call.1} parent=1 // pred_check_branch
      %13 = sbr.rel (0) target = $region5
    $region4: #{tpu_custom_call.1} parent=1 // pred_region
      %s15 = ssub.s32 2048, 2048
      %16 = vsyncadd [#allocation4], %s15
      %s17 = sshll.u32 [#allocation3], 4
      %s18 = int_to_ptr.vmem [resolvable:$true] %s17
      %23 = dma.hbm_to_vmem [thread:$0]  %s0, 2048, %s18, [#allocation4], 128, 128, 8
    $region5: #{tpu_custom_call.1} parent=1 // pred_fallthru
      _
    // Predicated region
    $region6: #{tpu_custom_call.1} parent=1 // pred_check
      _
    $region7: #{tpu_custom_call.1} parent=1 // pred_check_branch
      %25 = sbr.rel (0) target = $region9
    $region8: #{tpu_custom_call.1} parent=1 // pred_region
      %s27 = ssub.s32 2048, 2048
      %28 = vsyncadd [#allocation7], %s27
      %s29 = sshll.u32 [#allocation6], 4
      %s30 = int_to_ptr.vmem [resolvable:$true] %s29
      %35 = dma.hbm_to_vmem [thread:$0]  %s1, 2048, %s30, [#allocation7], 64, 64, 4
    $region9: #{tpu_custom_call.1} parent=1 // pred_fallthru
      _
    // Predicated region
    $region10: #{tpu_custom_call.1} parent=1 // pred_check
      _
    $region11: #{tpu_custom_call.1} parent=1 // pred_check_branch
      %37 = sbr.rel (0) target = $region13
    $region12: #{tpu_custom_call.1} parent=1 // pred_region
      _
    $region13: #{tpu_custom_call.1} parent=1 // pred_fallthru
      _
    // Predicated region
    $region14: #{tpu_custom_call.1} parent=1 // pred_check
      _
    $region15: #{tpu_custom_call.1} parent=1 // pred_check_branch
      %39 = sbr.rel (0) target = $region17
    $region16: #{tpu_custom_call.1} parent=1 // pred_region
      _
    $region17: #{tpu_custom_call.1} parent=1 // pred_fallthru
      _
    // Predicated region
    $region18: #{tpu_custom_call.1} parent=1 // pred_check
      _
    $region19: #{tpu_custom_call.1} parent=1 // pred_check_branch
      %41 = sbr.rel (0) target = $region21
    $region20: #{tpu_custom_call.1} parent=1 // pred_region
      %42 = dma.done [#allocation4], 2048
    $region21: #{tpu_custom_call.1} parent=1 // pred_fallthru
      _
    // Predicated region
    $region22: #{tpu_custom_call.1} parent=1 // pred_check
      _
    $region23: #{tpu_custom_call.1} parent=1 // pred_check_branch
      %44 = sbr.rel (0) target = $region25
    $region24: #{tpu_custom_call.1} parent=1 // pred_region
      %45 = dma.done [#allocation7], 2048
    $region25: #{tpu_custom_call.1} parent=1 // pred_fallthru
      _
    %p47 = scmp.eq.s32.totalorder 0, 0
    // Predicated region
    $region26: #{tpu_custom_call.1} parent=1 // pred_check
      %p48 = pneg %p47
    $region27: #{tpu_custom_call.1} parent=1 // pred_check_branch
      %50 = sbr.rel (%p48) target = $region29
    $region28: #{tpu_custom_call.1} parent=1 // pred_region
      %51 = vst [vmem:[#allocation2] sm:$0xff] 0.0
      %52 = vst [vmem:[#allocation2 + $0x8] sm:$0xff] 0.0
      %53 = vst [vmem:[#allocation2 + $0x10] sm:$0xff] 0.0
      %54 = vst [vmem:[#allocation2 + $0x18] sm:$0xff] 0.0
      %55 = vst [vmem:[#allocation2 + $0x20] sm:$0xff] 0.0
      %56 = vst [vmem:[#allocation2 + $0x28] sm:$0xff] 0.0
      %57 = vst [vmem:[#allocation2 + $0x30] sm:$0xff] 0.0
      %58 = vst [vmem:[#allocation2 + $0x38] sm:$0xff] 0.0
      %59 = vst [vmem:[#allocation2 + $0x40] sm:$0xff] 0.0
      %60 = vst [vmem:[#allocation2 + $0x48] sm:$0xff] 0.0
      %61 = vst [vmem:[#allocation2 + $0x50] sm:$0xff] 0.0
      %62 = vst [vmem:[#allocation2 + $0x58] sm:$0xff] 0.0
      %63 = vst [vmem:[#allocation2 + $0x60] sm:$0xff] 0.0
      %64 = vst [vmem:[#allocation2 + $0x68] sm:$0xff] 0.0
      %65 = vst [vmem:[#allocation2 + $0x70] sm:$0xff] 0.0
      %66 = vst [vmem:[#allocation2 + $0x78] sm:$0xff] 0.0
    $region29: #{tpu_custom_call.1} parent=1 // pred_fallthru
      _
    %v67 = vld [vmem:[#allocation2] sm:$0xff]
    %v68 = vld [vmem:[#allocation2 + $0x8] sm:$0xff]
    %v69 = vld [vmem:[#allocation2 + $0x10] sm:$0xff]
    %v70 = vld [vmem:[#allocation2 + $0x18] sm:$0xff]
    %v71 = vld [vmem:[#allocation2 + $0x20] sm:$0xff]
    %v72 = vld [vmem:[#allocation2 + $0x28] sm:$0xff]
    %v73 = vld [vmem:[#allocation2 + $0x30] sm:$0xff]
    %v74 = vld [vmem:[#allocation2 + $0x38] sm:$0xff]
    %v75 = vld [vmem:[#allocation2 + $0x40] sm:$0xff]
    %v76 = vld [vmem:[#allocation2 + $0x48] sm:$0xff]
    %v77 = vld [vmem:[#allocation2 + $0x50] sm:$0xff]
    %v78 = vld [vmem:[#allocation2 + $0x58] sm:$0xff]
    %v79 = vld [vmem:[#allocation2 + $0x60] sm:$0xff]
    %v80 = vld [vmem:[#allocation2 + $0x68] sm:$0xff]
    %v81 = vld [vmem:[#allocation2 + $0x70] sm:$0xff]
    %v82 = vld [vmem:[#allocation2 + $0x78] sm:$0xff]
    %v83 = vld [vmem:[#allocation3] sm:$0xff]
    %v84 = vld [vmem:[#allocation3 + $0x8] sm:$0xff]
    %v85 = vld [vmem:[#allocation3 + $0x10] sm:$0xff]
    %v86 = vld [vmem:[#allocation3 + $0x18] sm:$0xff]
    %v87 = vld [vmem:[#allocation3 + $0x20] sm:$0xff]
    %v88 = vld [vmem:[#allocation3 + $0x28] sm:$0xff]
    %v89 = vld [vmem:[#allocation3 + $0x30] sm:$0xff]
    %v90 = vld [vmem:[#allocation3 + $0x38] sm:$0xff]
    %v91 = vld [vmem:[#allocation3 + $0x40] sm:$0xff]
    %v92 = vld [vmem:[#allocation3 + $0x48] sm:$0xff]
    %v93 = vld [vmem:[#allocation3 + $0x50] sm:$0xff]
    %v94 = vld [vmem:[#allocation3 + $0x58] sm:$0xff]
    %v95 = vld [vmem:[#allocation3 + $0x60] sm:$0xff]
    %v96 = vld [vmem:[#allocation3 + $0x68] sm:$0xff]
    %v97 = vld [vmem:[#allocation3 + $0x70] sm:$0xff]
    %v98 = vld [vmem:[#allocation3 + $0x78] sm:$0xff]
    %v99 = vld [vmem:[#allocation6] sm:$0xf]
    %v100 = vld [vmem:[#allocation6 + $0x4] sm:$0xf]
    %v101 = vld [vmem:[#allocation6 + $0x8] sm:$0xf]
    %v102 = vld [vmem:[#allocation6 + $0xc] sm:$0xf]
    %v103 = vld [vmem:[#allocation6 + $0x10] sm:$0xf]
    %v104 = vld [vmem:[#allocation6 + $0x14] sm:$0xf]
    %v105 = vld [vmem:[#allocation6 + $0x18] sm:$0xf]
    %v106 = vld [vmem:[#allocation6 + $0x1c] sm:$0xf]
    %v107 = vld [vmem:[#allocation6 + $0x20] sm:$0xf]
    %v108 = vld [vmem:[#allocation6 + $0x24] sm:$0xf]
    %v109 = vld [vmem:[#allocation6 + $0x28] sm:$0xf]
    %v110 = vld [vmem:[#allocation6 + $0x2c] sm:$0xf]
    %v111 = vld [vmem:[#allocation6 + $0x30] sm:$0xf]
    %v112 = vld [vmem:[#allocation6 + $0x34] sm:$0xf]
    %v113 = vld [vmem:[#allocation6 + $0x38] sm:$0xf]
    %v114 = vld [vmem:[#allocation6 + $0x3c] sm:$0xf]
    %v115 = vld [vmem:[#allocation6 + $0x40] sm:$0xf]
    %v116 = vld [vmem:[#allocation6 + $0x44] sm:$0xf]
    %v117 = vld [vmem:[#allocation6 + $0x48] sm:$0xf]
    %v118 = vld [vmem:[#allocation6 + $0x4c] sm:$0xf]
    %v119 = vld [vmem:[#allocation6 + $0x50] sm:$0xf]
    %v120 = vld [vmem:[#allocation6 + $0x54] sm:$0xf]
    %v121 = vld [vmem:[#allocation6 + $0x58] sm:$0xf]
    %v122 = vld [vmem:[#allocation6 + $0x5c] sm:$0xf]
    %v123 = vld [vmem:[#allocation6 + $0x60] sm:$0xf]
    %v124 = vld [vmem:[#allocation6 + $0x64] sm:$0xf]
    %v125 = vld [vmem:[#allocation6 + $0x68] sm:$0xf]
    %v126 = vld [vmem:[#allocation6 + $0x6c] sm:$0xf]
    %v127 = vld [vmem:[#allocation6 + $0x70] sm:$0xf]
    %v128 = vld [vmem:[#allocation6 + $0x74] sm:$0xf]
    %v129 = vld [vmem:[#allocation6 + $0x78] sm:$0xf]
    %v130 = vld [vmem:[#allocation6 + $0x7c] sm:$0xf]
    %v147 = vunpack.c.l.b16 %v83
    %v148 = vunpack.c.h.b16 %v83
    %v149 = vunpack.c.l.b16 %v84
    %v150 = vunpack.c.h.b16 %v84
    %v151 = vunpack.c.l.b16 %v85
    %v152 = vunpack.c.h.b16 %v85
    %v153 = vunpack.c.l.b16 %v86
    %v154 = vunpack.c.h.b16 %v86
    %v155 = vunpack.c.l.b16 %v87
    %v156 = vunpack.c.h.b16 %v87
    %v157 = vunpack.c.l.b16 %v88
    %v158 = vunpack.c.h.b16 %v88
    %v159 = vunpack.c.l.b16 %v89
    %v160 = vunpack.c.h.b16 %v89
    %v161 = vunpack.c.l.b16 %v90
    %v162 = vunpack.c.h.b16 %v90
    %v163 = vunpack.c.l.b16 %v91
    %v164 = vunpack.c.h.b16 %v91
    %v165 = vunpack.c.l.b16 %v92
    %v166 = vunpack.c.h.b16 %v92
    %v167 = vunpack.c.l.b16 %v93
    %v168 = vunpack.c.h.b16 %v93
    %v169 = vunpack.c.l.b16 %v94
    %v170 = vunpack.c.h.b16 %v94
    %v171 = vunpack.c.l.b16 %v95
    %v172 = vunpack.c.h.b16 %v95
    %v173 = vunpack.c.l.b16 %v96
    %v174 = vunpack.c.h.b16 %v96
    %v175 = vunpack.c.l.b16 %v97
    %v176 = vunpack.c.h.b16 %v97
    %v177 = vunpack.c.l.b16 %v98
    %v178 = vunpack.c.h.b16 %v98
    %v179 = vpack.c.b16 %v149, %v147
    %v180 = vpack.c.b16 %v150, %v148
    %v181 = vpack.c.b16 %v153, %v151
    %v182 = vpack.c.b16 %v154, %v152
    %v183 = vpack.c.b16 %v157, %v155
    %v184 = vpack.c.b16 %v158, %v156
    %v185 = vpack.c.b16 %v161, %v159
    %v186 = vpack.c.b16 %v162, %v160
    %v187 = vpack.c.b16 %v165, %v163
    %v188 = vpack.c.b16 %v166, %v164
    %v189 = vpack.c.b16 %v169, %v167
    %v190 = vpack.c.b16 %v170, %v168
    %v191 = vpack.c.b16 %v173, %v171
    %v192 = vpack.c.b16 %v174, %v172
    %v193 = vpack.c.b16 %v177, %v175
    %v194 = vpack.c.b16 %v178, %v176
    %v243 = vunpack.c.l.b16 %v99
    %v244 = vunpack.c.l.b16 %v100
    %v245 = vunpack.c.l.b16 %v101
    %v246 = vunpack.c.l.b16 %v102
    %v247 = vunpack.c.l.b16 %v103
    %v248 = vunpack.c.l.b16 %v104
    %v249 = vunpack.c.l.b16 %v105
    %v250 = vunpack.c.l.b16 %v106
    %v251 = vunpack.c.l.b16 %v107
    %v252 = vunpack.c.l.b16 %v108
    %v253 = vunpack.c.l.b16 %v109
    %v254 = vunpack.c.l.b16 %v110
    %v255 = vunpack.c.l.b16 %v111
    %v256 = vunpack.c.l.b16 %v112
    %v257 = vunpack.c.l.b16 %v113
    %v258 = vunpack.c.l.b16 %v114
    %v259 = vunpack.c.l.b16 %v115
    %v260 = vunpack.c.l.b16 %v116
    %v261 = vunpack.c.l.b16 %v117
    %v262 = vunpack.c.l.b16 %v118
    %v263 = vunpack.c.l.b16 %v119
    %v264 = vunpack.c.l.b16 %v120
    %v265 = vunpack.c.l.b16 %v121
    %v266 = vunpack.c.l.b16 %v122
    %v267 = vunpack.c.l.b16 %v123
    %v268 = vunpack.c.l.b16 %v124
    %v269 = vunpack.c.l.b16 %v125
    %v270 = vunpack.c.l.b16 %v126
    %v271 = vunpack.c.l.b16 %v127
    %v272 = vunpack.c.l.b16 %v128
    %v273 = vunpack.c.l.b16 %v129
    %v274 = vunpack.c.l.b16 %v130
    %v275 = vpack.c.b16 %v244, %v243
    %v276 = vpack.c.b16 %v246, %v245
    %v277 = vpack.c.b16 %v248, %v247
    %v278 = vpack.c.b16 %v250, %v249
    %v279 = vpack.c.b16 %v252, %v251
    %v280 = vpack.c.b16 %v254, %v253
    %v281 = vpack.c.b16 %v256, %v255
    %v282 = vpack.c.b16 %v258, %v257
    %v283 = vpack.c.b16 %v260, %v259
    %v284 = vpack.c.b16 %v262, %v261
    %v285 = vpack.c.b16 %v264, %v263
    %v286 = vpack.c.b16 %v266, %v265
    %v287 = vpack.c.b16 %v268, %v267
    %v288 = vpack.c.b16 %v270, %v269
    %v289 = vpack.c.b16 %v272, %v271
    %v290 = vpack.c.b16 %v274, %v273
    %307 = vmatprep.subr.bf16.mxu0 0
    %308 = vmatpush1.bf16.msra.mxu0 %v275
    %309 = vmatprep.subr.bf16.mxu0 0
    %310 = vmatpush1.bf16.msra.mxu0 %v276
    %311 = vmatprep.subr.bf16.mxu0 0
    %312 = vmatpush1.bf16.msra.mxu0 %v277
    %313 = vmatprep.subr.bf16.mxu0 0
    %314 = vmatpush1.bf16.msra.mxu0 %v278
    %315 = vmatprep.subr.bf16.mxu0 0
    %316 = vmatpush1.bf16.msra.mxu0 %v279
    %317 = vmatprep.subr.bf16.mxu0 0
    %318 = vmatpush1.bf16.msra.mxu0 %v280
    %319 = vmatprep.subr.bf16.mxu0 0
    %320 = vmatpush1.bf16.msra.mxu0 %v281
    %321 = vmatprep.subr.bf16.mxu0 0
    %322 = vmatpush1.bf16.msra.mxu0 %v282
    %323 = vmatprep.subr.bf16.mxu0 0
    %324 = vmatpush1.bf16.msra.mxu0 %v283
    %325 = vmatprep.subr.bf16.mxu0 0
    %326 = vmatpush1.bf16.msra.mxu0 %v284
    %327 = vmatprep.subr.bf16.mxu0 0
    %328 = vmatpush1.bf16.msra.mxu0 %v285
    %329 = vmatprep.subr.bf16.mxu0 0
    %330 = vmatpush1.bf16.msra.mxu0 %v286
    %331 = vmatprep.subr.bf16.mxu0 0
    %332 = vmatpush1.bf16.msra.mxu0 %v287
    %333 = vmatprep.subr.bf16.mxu0 0
    %334 = vmatpush1.bf16.msra.mxu0 %v288
    %335 = vmatprep.subr.bf16.mxu0 0
    %336 = vmatpush1.bf16.msra.mxu0 %v289
    %337 = vmatprep.subr.bf16.mxu0 0
    %338 = vmatpush1.bf16.msra.mxu0 %v290
    %339 = vmatprep.mubr.bf16.mxu0 %v180
    %340 = vmatmul.mubr.bf16.gmra.mrb[0].mxu0 %v179
    %v341 = vpop.f32.mrb[0].mxu0
    %v342 = vadd.f32 0.0, %v341
    %v343 = vpop.f32.mrb[0].mxu0
    %v344 = vpop.f32.mrb[0].mxu0
    %v345 = vadd.f32 0.0, %v344
    %v346 = vpop.f32.mrb[0].mxu0
    %347 = vmatprep.mubr.bf16.mxu0 %v182
    %348 = vmatmul.mubr.bf16.gmra.mrb[0].mxu0 %v181
    %v349 = vpop.f32.mrb[0].mxu0
    %v350 = vadd.f32 0.0, %v349
    %v351 = vpop.f32.mrb[0].mxu0
    %v352 = vpop.f32.mrb[0].mxu0
    %v353 = vadd.f32 0.0, %v352
    %v354 = vpop.f32.mrb[0].mxu0
    %355 = vmatprep.mubr.bf16.mxu0 %v184
    %356 = vmatmul.mubr.bf16.gmra.mrb[0].mxu0 %v183
    %v357 = vpop.f32.mrb[0].mxu0
    %v358 = vadd.f32 0.0, %v357
    %v359 = vpop.f32.mrb[0].mxu0
    %v360 = vpop.f32.mrb[0].mxu0
    %v361 = vadd.f32 0.0, %v360
    %v362 = vpop.f32.mrb[0].mxu0
    %363 = vmatprep.mubr.bf16.mxu0 %v186
    %364 = vmatmul.mubr.bf16.gmra.mrb[0].mxu0 %v185
    %v365 = vpop.f32.mrb[0].mxu0
    %v366 = vadd.f32 0.0, %v365
    %v367 = vpop.f32.mrb[0].mxu0
    %v368 = vpop.f32.mrb[0].mxu0
    %v369 = vadd.f32 0.0, %v368
    %v370 = vpop.f32.mrb[0].mxu0
    %371 = vmatprep.mubr.bf16.mxu0 %v188
    %372 = vmatmul.mubr.bf16.gmra.mrb[0].mxu0 %v187
    %v373 = vpop.f32.mrb[0].mxu0
    %v374 = vadd.f32 0.0, %v373
    %v375 = vpop.f32.mrb[0].mxu0
    %v376 = vpop.f32.mrb[0].mxu0
    %v377 = vadd.f32 0.0, %v376
    %v378 = vpop.f32.mrb[0].mxu0
    %379 = vmatprep.mubr.bf16.mxu0 %v190
    %380 = vmatmul.mubr.bf16.gmra.mrb[0].mxu0 %v189
    %v381 = vpop.f32.mrb[0].mxu0
    %v382 = vadd.f32 0.0, %v381
    %v383 = vpop.f32.mrb[0].mxu0
    %v384 = vpop.f32.mrb[0].mxu0
    %v385 = vadd.f32 0.0, %v384
    %v386 = vpop.f32.mrb[0].mxu0
    %387 = vmatprep.mubr.bf16.mxu0 %v192
    %388 = vmatmul.mubr.bf16.gmra.mrb[0].mxu0 %v191
    %v389 = vpop.f32.mrb[0].mxu0
    %v390 = vadd.f32 0.0, %v389
    %v391 = vpop.f32.mrb[0].mxu0
    %v392 = vpop.f32.mrb[0].mxu0
    %v393 = vadd.f32 0.0, %v392
    %v394 = vpop.f32.mrb[0].mxu0
    %395 = vmatprep.mubr.bf16.mxu0 %v194
    %396 = vmatmul.mubr.bf16.gmra.mrb[0].mxu0 %v193
    %v397 = vpop.f32.mrb[0].mxu0
    %v398 = vadd.f32 0.0, %v397
    %v399 = vpop.f32.mrb[0].mxu0
    %v400 = vpop.f32.mrb[0].mxu0
    %v401 = vadd.f32 0.0, %v400
    %v402 = vpop.f32.mrb[0].mxu0
    %403 = vdwg.mxu0
    %v404 = vadd.f32 %v67, %v342
    %v405 = vadd.f32 %v68, %v345
    %v406 = vadd.f32 %v69, %v350
    %v407 = vadd.f32 %v70, %v353
    %v408 = vadd.f32 %v71, %v358
    %v409 = vadd.f32 %v72, %v361
    %v410 = vadd.f32 %v73, %v366
    %v411 = vadd.f32 %v74, %v369
    %v412 = vadd.f32 %v75, %v374
    %v413 = vadd.f32 %v76, %v377
    %v414 = vadd.f32 %v77, %v382
    %v415 = vadd.f32 %v78, %v385
    %v416 = vadd.f32 %v79, %v390
    %v417 = vadd.f32 %v80, %v393
    %v418 = vadd.f32 %v81, %v398
    %v419 = vadd.f32 %v82, %v401
    %420 = vst [vmem:[#allocation2] sm:$0xff] %v404
    %421 = vst [vmem:[#allocation2 + $0x8] sm:$0xff] %v405
    %422 = vst [vmem:[#allocation2 + $0x10] sm:$0xff] %v406
    %423 = vst [vmem:[#allocation2 + $0x18] sm:$0xff] %v407
    %424 = vst [vmem:[#allocation2 + $0x20] sm:$0xff] %v408
    %425 = vst [vmem:[#allocation2 + $0x28] sm:$0xff] %v409
    %426 = vst [vmem:[#allocation2 + $0x30] sm:$0xff] %v410
    %427 = vst [vmem:[#allocation2 + $0x38] sm:$0xff] %v411
    %428 = vst [vmem:[#allocation2 + $0x40] sm:$0xff] %v412
    %429 = vst [vmem:[#allocation2 + $0x48] sm:$0xff] %v413
    %430 = vst [vmem:[#allocation2 + $0x50] sm:$0xff] %v414
    %431 = vst [vmem:[#allocation2 + $0x58] sm:$0xff] %v415
    %432 = vst [vmem:[#allocation2 + $0x60] sm:$0xff] %v416
    %433 = vst [vmem:[#allocation2 + $0x68] sm:$0xff] %v417
    %434 = vst [vmem:[#allocation2 + $0x70] sm:$0xff] %v418
    %435 = vst [vmem:[#allocation2 + $0x78] sm:$0xff] %v419
    // Predicated region
    $region30: #{tpu_custom_call.1} parent=1 // pred_check
      %p436 = pneg %p47
    $region31: #{tpu_custom_call.1} parent=1 // pred_check_branch
      %438 = sbr.rel (%p436) target = $region33
    $region32: #{tpu_custom_call.1} parent=1 // pred_region
      %v439 = vld [vmem:[#allocation2] sm:$0xff]
      %v440 = vld [vmem:[#allocation2 + $0x8] sm:$0xff]
      %v441 = vld [vmem:[#allocation2 + $0x10] sm:$0xff]
      %v442 = vld [vmem:[#allocation2 + $0x18] sm:$0xff]
      %v443 = vld [vmem:[#allocation2 + $0x20] sm:$0xff]
      %v444 = vld [vmem:[#allocation2 + $0x28] sm:$0xff]
      %v445 = vld [vmem:[#allocation2 + $0x30] sm:$0xff]
      %v446 = vld [vmem:[#allocation2 + $0x38] sm:$0xff]
      %v447 = vld [vmem:[#allocation2 + $0x40] sm:$0xff]
      %v448 = vld [vmem:[#allocation2 + $0x48] sm:$0xff]
      %v449 = vld [vmem:[#allocation2 + $0x50] sm:$0xff]
      %v450 = vld [vmem:[#allocation2 + $0x58] sm:$0xff]
      %v451 = vld [vmem:[#allocation2 + $0x60] sm:$0xff]
      %v452 = vld [vmem:[#allocation2 + $0x68] sm:$0xff]
      %v453 = vld [vmem:[#allocation2 + $0x70] sm:$0xff]
      %v454 = vld [vmem:[#allocation2 + $0x78] sm:$0xff]
      %v455 = vld [vmem:[%s2] sm:$0x1]
      %v456 = vld [vmem:[%s3] sm:$0x1]
      %v457 = vadd.f32 %v439, %v440
      %v458 = vadd.f32 %v457, %v441
      %v459 = vadd.f32 %v458, %v442
      %v460 = vadd.f32 %v459, %v443
      %v461 = vadd.f32 %v460, %v444
      %v462 = vadd.f32 %v461, %v445
      %v463 = vadd.f32 %v462, %v446
      %v464 = vadd.f32 %v463, %v447
      %v465 = vadd.f32 %v464, %v448
      %v466 = vadd.f32 %v465, %v449
      %v467 = vadd.f32 %v466, %v450
      %v468 = vadd.f32 %v467, %v451
      %v469 = vadd.f32 %v468, %v452
      %v470 = vadd.f32 %v469, %v453
      %v471 = vadd.f32 %v470, %v454
      %v472 = vrot.slane %v471, 4
      %v473 = vadd.f32 %v471, %v472
      %v474 = vrot.slane %v473, 2
      %v475 = vadd.f32 %v473, %v474
      %v476 = vrot.slane %v475, 1
      %v477 = vadd.f32 %v475, %v476
      %v478 = vmul.f32 %v477, 0.0078125
      %v479 = vsub.f32 %v439, %v478
      %v480 = vsub.f32 %v440, %v478
      %v481 = vsub.f32 %v441, %v478
      %v482 = vsub.f32 %v442, %v478
      %v483 = vsub.f32 %v443, %v478
      %v484 = vsub.f32 %v444, %v478
      %v485 = vsub.f32 %v445, %v478
      %v486 = vsub.f32 %v446, %v478
      %v487 = vsub.f32 %v447, %v478
      %v488 = vsub.f32 %v448, %v478
      %v489 = vsub.f32 %v449, %v478
      %v490 = vsub.f32 %v450, %v478
      %v491 = vsub.f32 %v451, %v478
      %v492 = vsub.f32 %v452, %v478
      %v493 = vsub.f32 %v453, %v478
      %v494 = vsub.f32 %v454, %v478
      %v495 = vmul.f32 %v479, %v479
      %v496 = vmul.f32 %v480, %v480
      %v497 = vmul.f32 %v481, %v481
      %v498 = vmul.f32 %v482, %v482
      %v499 = vmul.f32 %v483, %v483
      %v500 = vmul.f32 %v484, %v484
      %v501 = vmul.f32 %v485, %v485
      %v502 = vmul.f32 %v486, %v486
      %v503 = vmul.f32 %v487, %v487
      %v504 = vmul.f32 %v488, %v488
      %v505 = vmul.f32 %v489, %v489
      %v506 = vmul.f32 %v490, %v490
      %v507 = vmul.f32 %v491, %v491
      %v508 = vmul.f32 %v492, %v492
      %v509 = vmul.f32 %v493, %v493
      %v510 = vmul.f32 %v494, %v494
      %v511 = vadd.f32 %v495, %v496
      %v512 = vadd.f32 %v511, %v497
      %v513 = vadd.f32 %v512, %v498
      %v514 = vadd.f32 %v513, %v499
      %v515 = vadd.f32 %v514, %v500
      %v516 = vadd.f32 %v515, %v501
      %v517 = vadd.f32 %v516, %v502
      %v518 = vadd.f32 %v517, %v503
      %v519 = vadd.f32 %v518, %v504
      %v520 = vadd.f32 %v519, %v505
      %v521 = vadd.f32 %v520, %v506
      %v522 = vadd.f32 %v521, %v507
      %v523 = vadd.f32 %v522, %v508
      %v524 = vadd.f32 %v523, %v509
      %v525 = vadd.f32 %v524, %v510
      %v526 = vrot.slane %v525, 4
      %v527 = vadd.f32 %v525, %v526
      %v528 = vrot.slane %v527, 2
      %v529 = vadd.f32 %v527, %v528
      %v530 = vrot.slane %v529, 1
      %v531 = vadd.f32 %v529, %v530
      %v532 = vmul.f32 %v531, 0.0078125
      %v533 = vadd.f32 %v532, 1e-05
      %v534 = vrsqrt.pop %v533
      %v535 = vmul.f32 %v479, %v534
      %v536 = vmul.f32 %v480, %v534
      %v537 = vmul.f32 %v481, %v534
      %v538 = vmul.f32 %v482, %v534
      %v539 = vmul.f32 %v483, %v534
      %v540 = vmul.f32 %v484, %v534
      %v541 = vmul.f32 %v485, %v534
      %v542 = vmul.f32 %v486, %v534
      %v543 = vmul.f32 %v487, %v534
      %v544 = vmul.f32 %v488, %v534
      %v545 = vmul.f32 %v489, %v534
      %v546 = vmul.f32 %v490, %v534
      %v547 = vmul.f32 %v491, %v534
      %v548 = vmul.f32 %v492, %v534
      %v549 = vmul.f32 %v493, %v534
      %v550 = vmul.f32 %v494, %v534
      %v552 = vlaneseq
      %v553 = vshrl.u32 %v552, 7
      %v554 = vsub.s32 0, %v553
      %v555 = vrot.slane %v455, %v554
      %v557 = vmul.f32 %v535, %v555
      %v558 = vmul.f32 %v536, %v555
      %v559 = vmul.f32 %v537, %v555
      %v560 = vmul.f32 %v538, %v555
      %v561 = vmul.f32 %v539, %v555
      %v562 = vmul.f32 %v540, %v555
      %v563 = vmul.f32 %v541, %v555
      %v564 = vmul.f32 %v542, %v555
      %v565 = vmul.f32 %v543, %v555
      %v566 = vmul.f32 %v544, %v555
      %v567 = vmul.f32 %v545, %v555
      %v568 = vmul.f32 %v546, %v555
      %v569 = vmul.f32 %v547, %v555
      %v570 = vmul.f32 %v548, %v555
      %v571 = vmul.f32 %v549, %v555
      %v572 = vmul.f32 %v550, %v555
      %v574 = vlaneseq
      %v575 = vshrl.u32 %v574, 7
      %v576 = vsub.s32 0, %v575
      %v577 = vrot.slane %v456, %v576
      %v579 = vadd.f32 %v557, %v577
      %v580 = vadd.f32 %v558, %v577
      %v581 = vadd.f32 %v559, %v577
      %v582 = vadd.f32 %v560, %v577
      %v583 = vadd.f32 %v561, %v577
      %v584 = vadd.f32 %v562, %v577
      %v585 = vadd.f32 %v563, %v577
      %v586 = vadd.f32 %v564, %v577
      %v587 = vadd.f32 %v565, %v577
      %v588 = vadd.f32 %v566, %v577
      %v589 = vadd.f32 %v567, %v577
      %v590 = vadd.f32 %v568, %v577
      %v591 = vadd.f32 %v569, %v577
      %v592 = vadd.f32 %v570, %v577
      %v593 = vadd.f32 %v571, %v577
      %v594 = vadd.f32 %v572, %v577
      %v595 = vmax.f32 %v579, 0.0
      %v596 = vmax.f32 %v580, 0.0
      %v597 = vmax.f32 %v581, 0.0
      %v598 = vmax.f32 %v582, 0.0
      %v599 = vmax.f32 %v583, 0.0
      %v600 = vmax.f32 %v584, 0.0
      %v601 = vmax.f32 %v585, 0.0
      %v602 = vmax.f32 %v586, 0.0
      %v603 = vmax.f32 %v587, 0.0
      %v604 = vmax.f32 %v588, 0.0
      %v605 = vmax.f32 %v589, 0.0
      %v606 = vmax.f32 %v590, 0.0
      %v607 = vmax.f32 %v591, 0.0
      %v608 = vmax.f32 %v592, 0.0
      %v609 = vmax.f32 %v593, 0.0
      %v610 = vmax.f32 %v594, 0.0
      %v611 = vpack.c.bf16 %v596, %v595
      %v612 = vpack.c.bf16 %v598, %v597
      %v613 = vpack.c.bf16 %v600, %v599
      %v614 = vpack.c.bf16 %v602, %v601
      %v615 = vpack.c.bf16 %v604, %v603
      %v616 = vpack.c.bf16 %v606, %v605
      %v617 = vpack.c.bf16 %v608, %v607
      %v618 = vpack.c.bf16 %v610, %v609
      %v627 = vunpack.c.l.b16 %v611
      %v628 = vunpack.c.h.b16 %v611
      %v629 = vunpack.c.l.b16 %v612
      %v630 = vunpack.c.h.b16 %v612
      %v631 = vunpack.c.l.b16 %v613
      %v632 = vunpack.c.h.b16 %v613
      %v633 = vunpack.c.l.b16 %v614
      %v634 = vunpack.c.h.b16 %v614
      %v635 = vunpack.c.l.b16 %v615
      %v636 = vunpack.c.h.b16 %v615
      %v637 = vunpack.c.l.b16 %v616
      %v638 = vunpack.c.h.b16 %v616
      %v639 = vunpack.c.l.b16 %v617
      %v640 = vunpack.c.h.b16 %v617
      %v641 = vunpack.c.l.b16 %v618
      %v642 = vunpack.c.h.b16 %v618
      %v643 = vpack.c.b16 %v627, %v627
      %v644 = vpack.c.b16 %v628, %v628
      %v645 = vpack.c.b16 %v629, %v629
      %v646 = vpack.c.b16 %v630, %v630
      %v647 = vpack.c.b16 %v631, %v631
      %v648 = vpack.c.b16 %v632, %v632
      %v649 = vpack.c.b16 %v633, %v633
      %v650 = vpack.c.b16 %v634, %v634
      %v651 = vpack.c.b16 %v635, %v635
      %v652 = vpack.c.b16 %v636, %v636
      %v653 = vpack.c.b16 %v637, %v637
      %v654 = vpack.c.b16 %v638, %v638
      %v655 = vpack.c.b16 %v639, %v639
      %v656 = vpack.c.b16 %v640, %v640
      %v657 = vpack.c.b16 %v641, %v641
      %v658 = vpack.c.b16 %v642, %v642
      %675 = vst [vmem:[#allocation8] sm:$0xf] %v643
      %676 = vst [vmem:[#allocation8 + $0x4] sm:$0xf] %v644
      %677 = vst [vmem:[#allocation8 + $0x8] sm:$0xf] %v645
      %678 = vst [vmem:[#allocation8 + $0xc] sm:$0xf] %v646
      %679 = vst [vmem:[#allocation8 + $0x10] sm:$0xf] %v647
      %680 = vst [vmem:[#allocation8 + $0x14] sm:$0xf] %v648
      %681 = vst [vmem:[#allocation8 + $0x18] sm:$0xf] %v649
      %682 = vst [vmem:[#allocation8 + $0x1c] sm:$0xf] %v650
      %683 = vst [vmem:[#allocation8 + $0x20] sm:$0xf] %v651
      %684 = vst [vmem:[#allocation8 + $0x24] sm:$0xf] %v652
      %685 = vst [vmem:[#allocation8 + $0x28] sm:$0xf] %v653
      %686 = vst [vmem:[#allocation8 + $0x2c] sm:$0xf] %v654
      %687 = vst [vmem:[#allocation8 + $0x30] sm:$0xf] %v655
      %688 = vst [vmem:[#allocation8 + $0x34] sm:$0xf] %v656
      %689 = vst [vmem:[#allocation8 + $0x38] sm:$0xf] %v657
      %690 = vst [vmem:[#allocation8 + $0x3c] sm:$0xf] %v658
    $region33: #{tpu_custom_call.1} parent=1 // pred_fallthru
      _
    // Predicated region
    $region34: #{tpu_custom_call.1} parent=1 // pred_check
      _
    $region35: #{tpu_custom_call.1} parent=1 // pred_check_branch
      %692 = sbr.rel (0) target = $region37
    $region36: #{tpu_custom_call.1} parent=1 // pred_region
      %s694 = ssub.s32 1024, 1024
      %695 = vsyncadd [#allocation5], %s694
      %s696 = sshll.u32 [#allocation8], 4
      %s697 = int_to_ptr.vmem [resolvable:$true] %s696
      %702 = dma.vmem_to_hbm [thread:$0]  %s697, 1024, %s4, [#allocation5], 64, 64, 4
    $region37: #{tpu_custom_call.1} parent=1 // pred_fallthru
      _
    // Predicated region
    $region38: #{tpu_custom_call.1} parent=1 // pred_check
      _
    $region39: #{tpu_custom_call.1} parent=1 // pred_check_branch
      %704 = sbr.rel (0) target = $region41
    $region40: #{tpu_custom_call.1} parent=1 // pred_region
      %705 = dma.done [#allocation5], 1024
    $region41: #{tpu_custom_call.1} parent=1 // pred_fallthru
      _
    %706 = vsyncpa [#allocation4], 1
    %707 = vsyncpa [#allocation7], 1
    %708 = vsyncpa [#allocation5], 1

</llo_original>
